<compile_context>
chip_gen: v5e
topology: v5e:2x2
jax: 0.10.0
libtpu: 0.0.40
codegen_flags: <defaults>
</compile_context>

<pallas_src>
import functools
import math

import jax
import jax.numpy as jnp
from jax.experimental import pallas as pl
from jax.experimental.pallas import tpu as pltpu

_LANE = 128
_SUBLANE = 8
_MAX_TILE_ROWS = 8192          # 8192 * 128 * 4B = 4 MiB per f32 input buffer
_VMEM_LIMIT_BYTES = 48 << 20   # safe on v5e/v6e (128 MiB phys) and v7x (64 MiB)


def _cdiv(a: int, b: int) -> int:
    return -(-a // b)


def _round_up(x: int, m: int) -> int:
    return ((x + m - 1) // m) * m


def _rmse_partial_kernel(pred_ref, target_ref, out_ref, *,
                         tile_m: int, tiles_per_par: int, rows: int):
    """Accumulate sum((pred - target)^2) into a per-core (8, 128) partial block."""
    c = pl.program_id(0)  # parallel axis (megacore split on v7x)
    k = pl.program_id(1)  # sequential reduction axis

    @pl.when(k == 0)
    def _():
        out_ref[...] = jnp.zeros_like(out_ref)

    tile_idx = c * tiles_per_par + k
    row_start = tile_idx * tile_m

    def _accumulate(sq):
        # VPU-only cross-vreg partial reduction into the resident accumulator.
        out_ref[0] += jnp.sum(sq.reshape(tile_m // _SUBLANE, _SUBLANE, _LANE),
                              axis=0)

    # Fast path: full in-bounds tile -> no iota, no mask (steady state).
    @pl.when(row_start + tile_m <= rows)
    def _():
        p = pred_ref[...].astype(jnp.float32)
        t = target_ref[...].astype(jnp.float32)
        d = p - t
        _accumulate(d * d)

    # Cold path: the single ragged boundary tile.  Keep the select (NOT a
    # multiply-by-mask) so stale out-of-bounds data (possibly NaN/Inf) cannot
    # poison the sum.
    @pl.when(jnp.logical_and(row_start < rows, row_start + tile_m > rows))
    def _():
        p = pred_ref[...].astype(jnp.float32)
        t = target_ref[...].astype(jnp.float32)
        d = p - t
        sq = d * d
        row_ids = jax.lax.broadcasted_iota(jnp.int32, (tile_m, _LANE), 0)
        valid = (row_start + row_ids) < rows
        _accumulate(jnp.where(valid, sq, 0.0))

    # Fully-clamped logical tiles (row_start >= rows) skip compute entirely.


def rmse_loss(pred: jax.Array, target: jax.Array, eps: float = 1e-8,
              max_tile_rows: int = _MAX_TILE_ROWS) -> jax.Array:
    """Pallas equivalent of torch.sqrt(F.mse_loss(pred, target) + eps)."""
    if pred.shape != target.shape:
        raise ValueError(f"pred/target shape mismatch: {pred.shape} vs {target.shape}")
    n_elems = math.prod(pred.shape)
    if n_elems == 0:
        raise ValueError("RMSELoss is undefined for empty tensors")

    p = pred.reshape(-1)
    t = target.reshape(-1)

    rows = n_elems // _LANE          # full lane-dense rows handled by the kernel
    n_main = rows * _LANE
    tail = n_elems - n_main          # < 128 leftover elements

    # Tiny tail reduction in plain jnp (static size, at most 127 elements).
    if tail:
        dt = p[n_main:].astype(jnp.float32) - t[n_main:].astype(jnp.float32)
        tail_sum = jnp.sum(dt * dt)
    else:
        tail_sum = jnp.float32(0.0)

    if rows == 0:
        # Fewer than 128 elements total: nothing for the kernel to do.
        total = tail_sum
    else:
        p_main = p[:n_main].reshape(rows, _LANE)
        t_main = t[:n_main].reshape(rows, _LANE)

        # Big row tiles; small inputs collapse to a single (sublane-rounded)
        # tile whose ragged edge is handled by the in-kernel cold path.
        tile_m = min(_round_up(max(max_tile_rows, _SUBLANE), _SUBLANE),
                     _round_up(rows, _SUBLANE))
        tiles_total = _cdiv(rows, tile_m)

        # 2-way split of the reduction over a leading "parallel" axis so v7x's
        # two TensorCores each stream half the tiles.
        n_par = 2 if tiles_total >= 2 else 1
        tiles_per_par = _cdiv(tiles_total, n_par)

        def in_index_map(c, k):
            # Clamp so logical tiles past the end re-read the last real block;
            # the kernel skips their compute via pl.when.
            return (jnp.minimum(c * tiles_per_par + k, tiles_total - 1), 0)

        kernel = functools.partial(
            _rmse_partial_kernel,
            tile_m=tile_m, tiles_per_par=tiles_per_par, rows=rows,
        )

        partials = pl.pallas_call(
            kernel,
            out_shape=jax.ShapeDtypeStruct((n_par, _SUBLANE, _LANE), jnp.float32),
            grid=(n_par, tiles_per_par),
            in_specs=[
                pl.BlockSpec((tile_m, _LANE), in_index_map),
                pl.BlockSpec((tile_m, _LANE), in_index_map),
            ],
            out_specs=pl.BlockSpec((1, _SUBLANE, _LANE), lambda c, k: (c, 0, 0)),
            compiler_params=pltpu.CompilerParams(
                dimension_semantics=("parallel", "arbitrary"),
                vmem_limit_bytes=_VMEM_LIMIT_BYTES,
            ),
        )(p_main, t_main)

        total = jnp.sum(partials) + tail_sum

    # Finalize: mean over the true (static) element count, sqrt(mse + eps)
    # (eps inside the sqrt, matching the torch module).
    return jnp.sqrt(total / float(n_elems) + jnp.float32(eps))


def _reference(pred, target, eps=1e-8):
    d = pred.astype(jnp.float32) - target.astype(jnp.float32)
    return jnp.sqrt(jnp.mean(d * d) + eps)


if __name__ == "__main__":
    key = jax.random.PRNGKey(0)
    k1, k2, k3, k4 = jax.random.split(key, 4)

    # Test 1: small NCHW-like f32 tensors (single full tile, fast path only).
    shape = (2, 4, 16, 16)
    pred = jax.random.normal(k1, shape, dtype=jnp.float32)
    target = jax.random.normal(k2, shape, dtype=jnp.float32)
    loss = rmse_loss(pred, target)
    jax.block_until_ready(loss)
    ref = _reference(pred, target)
    assert jnp.allclose(loss, ref, rtol=1e-5, atol=1e-6), (loss, ref)

    # Test 2: ragged size + bf16 inputs, tiny tile override to exercise the
    # multi-tile path (parallel split, fast tiles, ragged cold-path tile,
    # fully-clamped skipped tile, and the <128-element wrapper tail).
    shape2 = (5, 487)  # 2435 elements -> rows=19, tile_m=8 -> 3 real tiles + tail=3
    pred2 = jax.random.normal(k3, shape2, dtype=jnp.bfloat16)
    target2 = jax.random.normal(k4, shape2, dtype=jnp.bfloat16)
    loss2 = rmse_loss(pred2, target2, max_tile_rows=8)
    jax.block_until_ready(loss2)
    ref2 = _reference(pred2, target2)
    assert jnp.allclose(loss2, ref2, rtol=1e-5, atol=1e-6), (loss2, ref2)

    print("KERNEL_OK")
</pallas_src>

<mosaic_0001>
module attributes {stable_mosaic.version = 11 : i64} {
  func.func @_rmse_partial_kernel(%arg0: i32, %arg1: i32, %arg2: memref<16x128xf32, #tpu.memory_space<vmem>>, %arg3: memref<16x128xf32, #tpu.memory_space<vmem>>, %arg4: memref<1x8x128xf32, #tpu.memory_space<vmem>>) attributes {dimension_semantics = [#tpu.dimension_semantics<parallel>, #tpu.dimension_semantics<arbitrary>], iteration_bounds = array<i64: 1, 1>, scalar_prefetch = 0 : i64, scratch_operands = 0 : i64, tpu.core_type = #tpu.core_type<tc>, window_params = [{transform_indices = @transform_0, window_bounds = array<i64: 16, 128>}, {transform_indices = @transform_1, window_bounds = array<i64: 16, 128>}, {transform_indices = @transform_2, window_bounds = array<i64: 1, 8, 128>}]} {
    %c0_i32 = arith.constant 0 : i32
    %0 = arith.cmpi eq, %arg1, %c0_i32 : i32
    %1 = arith.extui %0 : i1 to i32
    %c0_i32_0 = arith.constant 0 : i32
    %2 = arith.cmpi ne, %1, %c0_i32_0 : i32
    scf.if %2 {
      %cst = arith.constant 0.000000e+00 : f32
      %16 = vector.broadcast %cst : f32 to vector<1x8x128xf32>
      %c0 = arith.constant 0 : index
      %c0_8 = arith.constant 0 : index
      %c0_9 = arith.constant 0 : index
      %17 = vector.load %arg4[%c0, %c0_8, %c0_9] : memref<1x8x128xf32, #tpu.memory_space<vmem>>, vector<1x8x128xf32>
      tpu.vector_store %arg4[%c0, %c0_8, %c0_9], %16 {strides = array<i32>} : memref<1x8x128xf32, #tpu.memory_space<vmem>>, vector<1x8x128xf32>,
    } else {
    }
    %c1_i32 = arith.constant 1 : i32
    %3 = arith.muli %arg0, %c1_i32 : i32
    %4 = arith.addi %3, %arg1 : i32
    %c16_i32 = arith.constant 16 : i32
    %5 = arith.muli %4, %c16_i32 : i32
    %c16_i32_1 = arith.constant 16 : i32
    %6 = arith.addi %5, %c16_i32_1 : i32
    %c16_i32_2 = arith.constant 16 : i32
    %7 = arith.cmpi sle, %6, %c16_i32_2 : i32
    %8 = arith.extui %7 : i1 to i32
    %c0_i32_3 = arith.constant 0 : i32
    %9 = arith.cmpi ne, %8, %c0_i32_3 : i32
    scf.if %9 {
      %c0 = arith.constant 0 : index
      %c0_8 = arith.constant 0 : index
      %16 = vector.load %arg2[%c0, %c0_8] : memref<16x128xf32, #tpu.memory_space<vmem>>, vector<16x128xf32>
      %c0_9 = arith.constant 0 : index
      %c0_10 = arith.constant 0 : index
      %17 = vector.load %arg3[%c0_9, %c0_10] : memref<16x128xf32, #tpu.memory_space<vmem>>, vector<16x128xf32>
      %18 = arith.subf %16, %17 : vector<16x128xf32>
      %19 = arith.mulf %18, %18 : vector<16x128xf32>
      %c0_11 = arith.constant 0 : index
      %c0_12 = arith.constant 0 : index
      %c0_13 = arith.constant 0 : index
      %20 = vector.load %arg4[%c0_11, %c0_12, %c0_13] : memref<1x8x128xf32, #tpu.memory_space<vmem>>, vector<1x8x128xf32>
      %21 = vector.shape_cast %20 : vector<1x8x128xf32> to vector<8x128xf32>
      %22 = vector.shape_cast %19 : vector<16x128xf32> to vector<2x8x128xf32>
      %cst = arith.constant dense<0.000000e+00> : vector<8x128xf32>
      %23 = vector.multi_reduction <add>, %22, %cst [0] : vector<2x8x128xf32> to vector<8x128xf32>
      %24 = arith.addf %21, %23 : vector<8x128xf32>
      %c0_14 = arith.constant 0 : index
      %c0_15 = arith.constant 0 : index
      %c0_16 = arith.constant 0 : index
      %25 = vector.load %arg4[%c0_14, %c0_15, %c0_16] : memref<1x8x128xf32, #tpu.memory_space<vmem>>, vector<1x8x128xf32>
      %26 = vector.shape_cast %25 : vector<1x8x128xf32> to vector<8x128xf32>
      %27 = vector.shape_cast %24 : vector<8x128xf32> to vector<1x8x128xf32>
      tpu.vector_store %arg4[%c0_14, %c0_15, %c0_16], %27 {strides = array<i32>} : memref<1x8x128xf32, #tpu.memory_space<vmem>>, vector<1x8x128xf32>,
    } else {
    }
    %c16_i32_4 = arith.constant 16 : i32
    %10 = arith.cmpi slt, %5, %c16_i32_4 : i32
    %c16_i32_5 = arith.constant 16 : i32
    %11 = arith.addi %5, %c16_i32_5 : i32
    %c16_i32_6 = arith.constant 16 : i32
    %12 = arith.cmpi sgt, %11, %c16_i32_6 : i32
    %13 = arith.andi %10, %12 : i1
    %14 = arith.extui %13 : i1 to i32
    %c0_i32_7 = arith.constant 0 : i32
    %15 = arith.cmpi ne, %14, %c0_i32_7 : i32
    scf.if %15 {
      %c0 = arith.constant 0 : index
      %c0_8 = arith.constant 0 : index
      %16 = vector.load %arg2[%c0, %c0_8] : memref<16x128xf32, #tpu.memory_space<vmem>>, vector<16x128xf32>
      %c0_9 = arith.constant 0 : index
      %c0_10 = arith.constant 0 : index
      %17 = vector.load %arg3[%c0_9, %c0_10] : memref<16x128xf32, #tpu.memory_space<vmem>>, vector<16x128xf32>
      %18 = arith.subf %16, %17 : vector<16x128xf32>
      %19 = arith.mulf %18, %18 : vector<16x128xf32>
      %20 = tpu.iota {dimensions = array<i32: 0>} : vector<16x128xi32>
      %21 = vector.broadcast %5 : i32 to vector<16x128xi32>
      %22 = arith.addi %21, %20 : vector<16x128xi32>
      %c16_i32_11 = arith.constant 16 : i32
      %23 = vector.broadcast %c16_i32_11 : i32 to vector<16x128xi32>
      %24 = arith.cmpi slt, %22, %23 : vector<16x128xi32>
      %cst = arith.constant 0.000000e+00 : f32
      %25 = vector.broadcast %cst : f32 to vector<16x128xf32>
      %26 = arith.select %24, %19, %25 : vector<16x128xi1>, vector<16x128xf32>
      %c0_12 = arith.constant 0 : index
      %c0_13 = arith.constant 0 : index
      %c0_14 = arith.constant 0 : index
      %27 = vector.load %arg4[%c0_12, %c0_13, %c0_14] : memref<1x8x128xf32, #tpu.memory_space<vmem>>, vector<1x8x128xf32>
      %28 = vector.shape_cast %27 : vector<1x8x128xf32> to vector<8x128xf32>
      %29 = vector.shape_cast %26 : vector<16x128xf32> to vector<2x8x128xf32>
      %cst_15 = arith.constant dense<0.000000e+00> : vector<8x128xf32>
      %30 = vector.multi_reduction <add>, %29, %cst_15 [0] : vector<2x8x128xf32> to vector<8x128xf32>
      %31 = arith.addf %28, %30 : vector<8x128xf32>
      %c0_16 = arith.constant 0 : index
      %c0_17 = arith.constant 0 : index
      %c0_18 = arith.constant 0 : index
      %32 = vector.load %arg4[%c0_16, %c0_17, %c0_18] : memref<1x8x128xf32, #tpu.memory_space<vmem>>, vector<1x8x128xf32>
      %33 = vector.shape_cast %32 : vector<1x8x128xf32> to vector<8x128xf32>
      %34 = vector.shape_cast %31 : vector<8x128xf32> to vector<1x8x128xf32>
      tpu.vector_store %arg4[%c0_16, %c0_17, %c0_18], %34 {strides = array<i32>} : memref<1x8x128xf32, #tpu.memory_space<vmem>>, vector<1x8x128xf32>,
    } else {
    }
    return
  }
  func.func @transform_0(%arg0: i32, %arg1: i32) -> (i32, i32) {
    %c1_i32 = arith.constant 1 : i32
    %0 = arith.muli %arg0, %c1_i32 : i32
    %1 = arith.addi %0, %arg1 : i32
    %c0_i32 = arith.constant 0 : i32
    %2 = arith.minsi %1, %c0_i32 : i32
    %c0_i32_0 = arith.constant 0 : i32
    %c0_i32_1 = arith.constant 0 : i32
    return %2, %c0_i32_0 : i32, i32
  }
  func.func @transform_1(%arg0: i32, %arg1: i32) -> (i32, i32) {
    %c1_i32 = arith.constant 1 : i32
    %0 = arith.muli %arg0, %c1_i32 : i32
    %1 = arith.addi %0, %arg1 : i32
    %c0_i32 = arith.constant 0 : i32
    %2 = arith.minsi %1, %c0_i32 : i32
    %c0_i32_0 = arith.constant 0 : i32
    %c0_i32_1 = arith.constant 0 : i32
    return %2, %c0_i32_0 : i32, i32
  }
  func.func @transform_2(%arg0: i32, %arg1: i32) -> (i32, i32, i32) {
    %c0_i32 = arith.constant 0 : i32
    %c0_i32_0 = arith.constant 0 : i32
    %c0_i32_1 = arith.constant 0 : i32
    return %arg0, %c0_i32, %c0_i32_0 : i32, i32, i32
  }
}

</mosaic_0001>

<llo_original>
// kernel: tpu_custom_call.1
$region0: #{tpu_custom_call.1}
  #allocation0 [shape = 'u32[]', space=smem, size = 0x4, offset = 0x4, fixed_abs, tag = 'smem constant byte address 0x4 - core index']
  #allocation1 [shape = 'u32[72,128]{1,0:T(1,128)}', space=vmem, size = 0x9000, scoped, tag = 'internal scratch']
  %s0 = inlined_call_operand.hbm [shape: f32[16,128], index: 0, kind: input, shape index: {}]
  %s1 = inlined_call_operand.hbm [shape: f32[16,128], index: 1, kind: input, shape index: {}]
  %s2 = inlined_call_operand.hbm [shape: f32[1,8,128], index: 2, kind: output, shape index: {}]
  %s3 = sld [smem:[#allocation0]]
  $region38: #{tpu_custom_call.1} parent=0
    _
  %s5 = ssub.s32 1, %s3
  %s6 = scalar_select 0, %s5, %s3
  $region1: #{tpu_custom_call.1} parent=0
    #allocation2 [shape = 'u8[8192]{0}', space=vmem, size = 0x2000, scoped, tag = 'input window, operand 0, single buffered']
    #allocation3 [shape = 's32[1]{0}', space=sflag, size = 0x4, scoped, tag = 'scoped memory for tpu_custom_call.1']
    #allocation4 [shape = 's32[1]{0}', space=sflag, size = 0x4, scoped, tag = 'scoped memory for tpu_custom_call.1']
    #allocation5 [shape = 'u8[8192]{0}', space=vmem, size = 0x2000, scoped, tag = 'input window, operand 1, single buffered']
    #allocation6 [shape = 's32[1]{0}', space=sflag, size = 0x4, scoped, tag = 'scoped memory for tpu_custom_call.1']
    #allocation7 [shape = 'u8[4096]{0}', space=vmem, size = 0x1000, scoped, tag = 'output window, operand 0, single buffered']
    %7 = vsyncpa [#allocation3], 0
    %8 = vsyncpa [#allocation6], 0
    %9 = vsyncpa [#allocation4], 0
    // Predicated region
    $region2: #{tpu_custom_call.1} parent=1 // pred_check
      _
    $region3: #{tpu_custom_call.1} parent=1 // pred_check_branch
      %11 = sbr.rel (0) target = $region5
    $region4: #{tpu_custom_call.1} parent=1 // pred_region
      %s12 = sadd.s32 0, 0
      %p13 = scmp.lt.s32.totalorder %s12, 0
      %s14 = scalar_select %p13, %s12, 0
      %s15 = smul.u32 2, %s14
      %17 = vsyncadd [#allocation3], 0
      %s18 = smul.addr %s15, 8
      %s19 = scalar_lea.hbm %s0, %s18
      %s20 = sshll.u32 %s19, 4
      %s21 = int_to_ptr.hbm [resolvable:$true] %s20
      %s22 = sshll.u32 [#allocation2], 4
      %s23 = int_to_ptr.vmem [resolvable:$true] %s22
      %28 = dma.hbm_to_vmem [thread:$0]  %s21, 256, %s23, [#allocation3], 128, 128, 8
    $region5: #{tpu_custom_call.1} parent=1 // pred_fallthru
      _
    // Predicated region
    $region6: #{tpu_custom_call.1} parent=1 // pred_check
      _
    $region7: #{tpu_custom_call.1} parent=1 // pred_check_branch
      %30 = sbr.rel (0) target = $region9
    $region8: #{tpu_custom_call.1} parent=1 // pred_region
      %s31 = sadd.s32 0, 0
      %p32 = scmp.lt.s32.totalorder %s31, 0
      %s33 = scalar_select %p32, %s31, 0
      %s34 = smul.u32 2, %s33
      %36 = vsyncadd [#allocation6], 0
      %s37 = smul.addr %s34, 8
      %s38 = scalar_lea.hbm %s1, %s37
      %s39 = sshll.u32 %s38, 4
      %s40 = int_to_ptr.hbm [resolvable:$true] %s39
      %s41 = sshll.u32 [#allocation5], 4
      %s42 = int_to_ptr.vmem [resolvable:$true] %s41
      %47 = dma.hbm_to_vmem [thread:$0]  %s40, 256, %s42, [#allocation6], 128, 128, 8
    $region9: #{tpu_custom_call.1} parent=1 // pred_fallthru
      _
    // Predicated region
    $region10: #{tpu_custom_call.1} parent=1 // pred_check
      _
    $region11: #{tpu_custom_call.1} parent=1 // pred_check_branch
      %49 = sbr.rel (0) target = $region13
    $region12: #{tpu_custom_call.1} parent=1 // pred_region
      %51 = dma.done [#allocation3], 256
    $region13: #{tpu_custom_call.1} parent=1 // pred_fallthru
      _
    // Predicated region
    $region14: #{tpu_custom_call.1} parent=1 // pred_check
      _
    $region15: #{tpu_custom_call.1} parent=1 // pred_check_branch
      %53 = sbr.rel (0) target = $region17
    $region16: #{tpu_custom_call.1} parent=1 // pred_region
      %55 = dma.done [#allocation6], 256
    $region17: #{tpu_custom_call.1} parent=1 // pred_fallthru
      _
    %s56 = sadd.s32 0, 0
    %p57 = scmp.lt.s32.totalorder %s56, 0
    %s58 = scalar_select %p57, %s56, 0
    %s59 = smul.u32 2, %s58
    %s60 = sadd.s32 0, 0
    %p61 = scmp.lt.s32.totalorder %s60, 0
    %s62 = scalar_select %p61, %s60, 0
    %s63 = smul.u32 2, %s62
    %p64 = scmp.eq.s32.totalorder 0, 0
    // Predicated region
    $region18: #{tpu_custom_call.1} parent=1 // pred_check
      %p65 = pneg %p64
    $region19: #{tpu_custom_call.1} parent=1 // pred_check_branch
      %67 = sbr.rel (%p65) target = $region21
    $region20: #{tpu_custom_call.1} parent=1 // pred_region
      %68 = vst [vmem:[#allocation7] sm:$0xff] 0.0
    $region21: #{tpu_custom_call.1} parent=1 // pred_fallthru
      _
    %s69 = sadd.s32 0, 0
    %s70 = smul.u32 %s69, 16
    %s71 = sadd.s32 %s70, 16
    %p72 = scmp.le.s32.totalorder %s71, 16
    // Predicated region
    $region22: #{tpu_custom_call.1} parent=1 // pred_check
      %p73 = pneg %p72
    $region23: #{tpu_custom_call.1} parent=1 // pred_check_branch
      %75 = sbr.rel (%p73) target = $region25
    $region24: #{tpu_custom_call.1} parent=1 // pred_region
      %v76 = vld [vmem:[#allocation2] sm:$0xff]
      %v77 = vld [vmem:[#allocation2 + $0x8] sm:$0xff]
      %v78 = vld [vmem:[#allocation5] sm:$0xff]
      %v79 = vld [vmem:[#allocation5 + $0x8] sm:$0xff]
      %v80 = vsub.f32 %v76, %v78
      %v81 = vsub.f32 %v77, %v79
      %v82 = vmul.f32 %v80, %v80
      %v83 = vmul.f32 %v81, %v81
      %v84 = vld [vmem:[#allocation7] sm:$0xff]
      %v85 = vadd.f32 %v82, %v83
      %v86 = vadd.f32 %v84, %v85
      %87 = vst [vmem:[#allocation7] sm:$0xff] %v86
    $region25: #{tpu_custom_call.1} parent=1 // pred_fallthru
      _
    %p88 = scmp.lt.s32.totalorder %s70, 16
    %p89 = scmp.gt.s32.totalorder %s71, 16
    %p90 = pnand %p88, %p89
    %p91 = pneg %p90
    // Predicated region
    $region26: #{tpu_custom_call.1} parent=1 // pred_check
      _
    $region27: #{tpu_custom_call.1} parent=1 // pred_check_branch
      %93 = sbr.rel (%p90) target = $region29
    $region28: #{tpu_custom_call.1} parent=1 // pred_region
      %v94 = vld [vmem:[#allocation2] sm:$0xff]
      %v95 = vld [vmem:[#allocation2 + $0x8] sm:$0xff]
      %v96 = vld [vmem:[#allocation5] sm:$0xff]
      %v97 = vld [vmem:[#allocation5 + $0x8] sm:$0xff]
      %v98 = vsub.f32 %v94, %v96
      %v99 = vsub.f32 %v95, %v97
      %v100 = vmul.f32 %v98, %v98
      %v101 = vmul.f32 %v99, %v99
      %v102 = vlaneseq
      %v103 = vshrl.u32 %v102, 7
      %v104 = vadd.s32 %v103, 8
      %v105 = vstv %s70
      %v106 = vadd.s32 %v105, %v103
      %v107 = vadd.s32 %v105, %v104
      %vm108 = vcmp.lt.s32.totalorder %v106, 16
      %vm109 = vcmp.lt.s32.totalorder %v107, 16
      %v110 = vsel %vm108, %v100, 0.0
      %v111 = vsel %vm109, %v101, 0.0
      %v112 = vld [vmem:[#allocation7] sm:$0xff]
      %v113 = vadd.f32 %v110, %v111
      %v114 = vadd.f32 %v112, %v113
      %115 = vst [vmem:[#allocation7] sm:$0xff] %v114
    $region29: #{tpu_custom_call.1} parent=1 // pred_fallthru
      _
    // Predicated region
    $region30: #{tpu_custom_call.1} parent=1 // pred_check
      _
    $region31: #{tpu_custom_call.1} parent=1 // pred_check_branch
      %117 = sbr.rel (0) target = $region33
    $region32: #{tpu_custom_call.1} parent=1 // pred_region
      %119 = vsyncadd [#allocation4], 0
      %s121 = sshll.u32 [#allocation7], 4
      %s122 = int_to_ptr.vmem [resolvable:$true] %s121
      %s123 = sshll.u32 %s2, 4
      %s124 = int_to_ptr.hbm [resolvable:$true] %s123
      %126 = dma.vmem_to_hbm [thread:$0]  %s122, 128, %s124, [#allocation4]
    $region33: #{tpu_custom_call.1} parent=1 // pred_fallthru
      _
    // Predicated region
    $region34: #{tpu_custom_call.1} parent=1 // pred_check
      _
    $region35: #{tpu_custom_call.1} parent=1 // pred_check_branch
      %128 = sbr.rel (0) target = $region37
    $region36: #{tpu_custom_call.1} parent=1 // pred_region
      %130 = dma.done [#allocation4], 128
    $region37: #{tpu_custom_call.1} parent=1 // pred_fallthru
      _
    %131 = vsyncpa [#allocation3], 1
    %132 = vsyncpa [#allocation6], 1
    %133 = vsyncpa [#allocation4], 1

</llo_original>
